<compile_context>
chip_gen: v6e
topology: v6e:2x2x1
jax: 0.10.0
libtpu: 0.0.40
codegen_flags: <defaults>
</compile_context>

<pallas_src>
import math

import jax
import jax.numpy as jnp
from jax.experimental import pallas as pl
from jax.experimental.pallas import tpu as pltpu


def make_positional_encoding_table(d_model, max_len=5000, dtype=jnp.float32):
    """Replicates the PyTorch `pe` buffer, shape (max_len, d_model)."""
    position = jnp.arange(max_len, dtype=jnp.float32)[:, None]              # (max_len, 1)
    div_term = jnp.exp(jnp.arange(0, d_model, 2, dtype=jnp.float32)
                       * (-(math.log(10000.0) / d_model)))                  # (ceil(d/2),)
    angles = position * div_term                                            # (max_len, ceil(d/2))
    pe = jnp.zeros((max_len, d_model), dtype=jnp.float32)
    pe = pe.at[:, 0::2].set(jnp.sin(angles))
    n_odd = len(range(1, d_model, 2))          # == d_model // 2 (odd d_model like torch)
    pe = pe.at[:, 1::2].set(jnp.cos(angles)[:, :n_odd])
    return pe.astype(dtype)


def _pe_add_kernel(x_ref, pe_ref, o_ref):
    # x_ref / o_ref: (TS, TD) (batch dim squeezed out), pe_ref: (TS, TD), same dtype.
    o_ref[...] = x_ref[...] + pe_ref[...]


_SUBLANE_QUANTUM = {4: 8, 2: 16, 1: 32}


def _scoped_vmem_limit_bytes():
    """Generation-gated scoped-VMEM limit for this kernel."""
    cap = None
    try:
        cap = getattr(pltpu.get_tpu_info(), "vmem_capacity_bytes", None)
    except Exception:
        cap = None
    if cap is not None and cap <= (64 << 20):   # v7x-class: 64 MiB VMEM per TensorCore
        return 48 << 20
    return 64 << 20                             # v5e / v6e: 128 MiB physical VMEM


def _largest_divisor_tile(dim, max_tile, quantum):
    """Largest multiple of `quantum` that divides `dim`, capped at `max_tile`.
    Requires dim % quantum == 0."""
    t = min(dim, max(max_tile, quantum))
    t -= t % quantum
    while t > quantum:
        if dim % t == 0:
            return t
        t -= quantum
    return quantum


def positional_encoding(x, pe_table):
    """x: (B, S, D); pe_table: (max_len, D) with max_len >= S. Returns x + pe_table[:S]."""
    B, S, D = x.shape
    max_len, d_pe = pe_table.shape
    assert d_pe == D and max_len >= S

    itemsize = jnp.dtype(x.dtype).itemsize
    quantum = _SUBLANE_QUANTUM.get(itemsize, 8)          # dtype-aware sublane quantum
    vmem_limit = _scoped_vmem_limit_bytes()
    # 3 arrays (x, pe, out) x 2 pipeline buffers each; keep live tiles to ~half the limit.
    tile_budget_elems = max((vmem_limit // 2) // (6 * itemsize), quantum * 128)

    # Pre-cast pe once (constant buffer) -> no in-kernel cast, fewer pe DMA bytes for bf16.
    pe = pe_table if pe_table.dtype == x.dtype else pe_table.astype(x.dtype)

    # ---- Lane-dense fold: (B, S, D) -> (B, S/k, k*D) with (k*D) % 128 == 0 ----------
    k = 1
    if D % 128 != 0:
        k_cand = 128 // math.gcd(D, 128)                 # smallest k making k*D a 128-multiple
        if S % k_cand == 0:
            k = k_cand
    if k > 1:
        Sf, Df = S // k, k * D
        x_run = x.reshape(B, Sf, Df)
        if max_len % k == 0:                             # fold the whole table -> no slice copy
            pe_run, pe_rows = pe.reshape(max_len // k, Df), max_len // k
        else:
            pe_run, pe_rows = pe[:S].reshape(Sf, Df), Sf
    else:
        Sf, Df, x_run, pe_run, pe_rows = S, D, x, pe, max_len

    # ---- Tile choice: prefer TD = full feature dim (contiguous HBM transfers) -------
    TD = Df
    if TD * quantum > tile_budget_elems and Df % 128 == 0:
        TD = _largest_divisor_tile(Df, tile_budget_elems // quantum, 128)
    max_ts = max(tile_budget_elems // TD, quantum)

    pad = 0
    Sr = Sf
    if Sf % quantum == 0:
        TS = _largest_divisor_tile(Sf, max_ts, quantum)
        pe_arg = pe_run                                  # unsliced: only rows [0, Sf) touched
    elif 6 * Sf * TD * itemsize <= vmem_limit // 2:
        TS = Sf                                          # full-dim seq tile (legal, fits VMEM)
        pe_arg = pe_run[:Sf] if pe_rows != Sf else pe_run
    else:
        # Large awkward S: pad seq to a quantum multiple to keep tiles bounded/pipelined.
        pad = quantum - Sf % quantum
        Sr = Sf + pad
        x_run = jnp.pad(x_run, ((0, 0), (0, pad), (0, 0)))
        TS = _largest_divisor_tile(Sr, max_ts, quantum)
        pe_arg = pe_run if pe_rows >= Sr else jnp.pad(pe_run[:Sf], ((0, Sr - Sf), (0, 0)))

    grid = (Sr // TS, Df // TD, B)                       # batch innermost -> pe tile not re-DMAed
    # v7x has 2 TensorCores: make sure a "parallel" axis has >= 2 blocks of work.
    if grid[0] * grid[1] * grid[2] < 2 and TS % (2 * quantum) == 0:
        TS //= 2
        grid = (Sr // TS, Df // TD, B)

    out = pl.pallas_call(
        _pe_add_kernel,
        out_shape=jax.ShapeDtypeStruct((B, Sr, Df), x.dtype),
        grid_spec=pltpu.PrefetchScalarGridSpec(
            num_scalar_prefetch=0,
            grid=grid,
            in_specs=[
                pl.BlockSpec((None, TS, TD), lambda s, d, b: (b, s, d)),   # x (batch squeezed)
                pl.BlockSpec((TS, TD), lambda s, d, b: (s, d)),            # pe (no batch dep)
            ],
            out_specs=pl.BlockSpec((None, TS, TD), lambda s, d, b: (b, s, d)),
        ),
        compiler_params=pltpu.CompilerParams(
            dimension_semantics=("parallel", "parallel", "parallel"),
            vmem_limit_bytes=vmem_limit,
        ),
    )(x_run, pe_arg)

    if pad:
        out = out[:, :Sf, :]
    return out.reshape(B, S, D)


if __name__ == "__main__":
    key = jax.random.PRNGKey(0)

    B, S, D = 2, 8, 32            # batch=2, seq=8, d_model=32
    MAX_LEN = 64
    x = jax.random.normal(key, (B, S, D), dtype=jnp.float32)
    pe_table = make_positional_encoding_table(D, max_len=MAX_LEN, dtype=x.dtype)

    fwd = jax.jit(positional_encoding)
    out = jax.block_until_ready(fwd(x, pe_table))
    ref = x + pe_table[None, :S, :]

    if jnp.allclose(out, ref, atol=1e-6, rtol=1e-6):
        print("KERNEL_OK")
    else:
        print("KERNEL_MISMATCH")
</pallas_src>

<mosaic_0001>
module attributes {stable_mosaic.version = 11 : i64} {
  func.func @_pe_add_kernel(%arg0: i32, %arg1: i32, %arg2: i32, %arg3: memref<1x2x128xf32, #tpu.memory_space<vmem>>, %arg4: memref<2x128xf32, #tpu.memory_space<vmem>>, %arg5: memref<1x2x128xf32, #tpu.memory_space<vmem>>) attributes {dimension_semantics = [#tpu.dimension_semantics<parallel>, #tpu.dimension_semantics<parallel>, #tpu.dimension_semantics<parallel>], iteration_bounds = array<i64: 1, 1, 2>, scalar_prefetch = 0 : i64, scratch_operands = 0 : i64, tpu.core_type = #tpu.core_type<tc>, window_params = [{transform_indices = @transform_0, window_bounds = array<i64: 1, 2, 128>}, {transform_indices = @transform_1, window_bounds = array<i64: 2, 128>}, {transform_indices = @transform_2, window_bounds = array<i64: 1, 2, 128>}]} {
    %c0 = arith.constant 0 : index
    %c0_0 = arith.constant 0 : index
    %c0_1 = arith.constant 0 : index
    %0 = vector.load %arg3[%c0, %c0_0, %c0_1] : memref<1x2x128xf32, #tpu.memory_space<vmem>>, vector<1x2x128xf32>
    %1 = vector.shape_cast %0 : vector<1x2x128xf32> to vector<2x128xf32>
    %c0_2 = arith.constant 0 : index
    %c0_3 = arith.constant 0 : index
    %2 = vector.load %arg4[%c0_2, %c0_3] : memref<2x128xf32, #tpu.memory_space<vmem>>, vector<2x128xf32>
    %3 = arith.addf %1, %2 : vector<2x128xf32>
    %c0_4 = arith.constant 0 : index
    %c0_5 = arith.constant 0 : index
    %c0_6 = arith.constant 0 : index
    %4 = vector.load %arg5[%c0_4, %c0_5, %c0_6] : memref<1x2x128xf32, #tpu.memory_space<vmem>>, vector<1x2x128xf32>
    %5 = vector.shape_cast %4 : vector<1x2x128xf32> to vector<2x128xf32>
    %6 = vector.shape_cast %3 : vector<2x128xf32> to vector<1x2x128xf32>
    tpu.vector_store %arg5[%c0_4, %c0_5, %c0_6], %6 {strides = array<i32>} : memref<1x2x128xf32, #tpu.memory_space<vmem>>, vector<1x2x128xf32>,
    return
  }
  func.func @transform_0(%arg0: i32, %arg1: i32, %arg2: i32) -> (i32, i32, i32) {
    %c0_i32 = arith.constant 0 : i32
    return %arg2, %arg0, %arg1 : i32, i32, i32
  }
  func.func @transform_1(%arg0: i32, %arg1: i32, %arg2: i32) -> (i32, i32) {
    %c0_i32 = arith.constant 0 : i32
    return %arg0, %arg1 : i32, i32
  }
  func.func @transform_2(%arg0: i32, %arg1: i32, %arg2: i32) -> (i32, i32, i32) {
    %c0_i32 = arith.constant 0 : i32
    return %arg2, %arg0, %arg1 : i32, i32, i32
  }
}

</mosaic_0001>

<llo_original>
// kernel: positional_encoding.1
$region0: #{positional_encoding.1}
  #allocation0 [shape = 'u32[]', space=smem, size = 0x4, offset = 0x4, fixed_abs, tag = 'smem constant byte address 0x4 - core index']
  #allocation1 [shape = 'u32[144,128]{1,0:T(1,128)}', space=vmem, size = 0x12000, scoped, tag = 'internal scratch']
  %s0 = inlined_call_operand.vmem [shape: f32[2,2,128], index: 0, kind: input, shape index: {}]
  %s1 = inlined_call_operand.vmem [shape: f32[2,128], index: 1, kind: input, shape index: {}]
  %s2 = inlined_call_operand.vmem [shape: f32[2,2,128], index: 2, kind: output, shape index: {}]
  %s3 = sld [smem:[#allocation0]]
  $region41: #{positional_encoding.1} parent=0
    _
  %s5 = ssub.s32 1, %s3
  %s6 = scalar_select 0, %s5, %s3
  loop: start=0, step=1, limit=4
  $region2: #{positional_encoding.1} parent=0 // loop_pre_header
    _
  $region3: #{positional_encoding.1} parent=0 // loop_header
    %s8 = sphi 0, %s12
    %p9 = scmp.ge.s32.totalorder %s8, 4
    %s15 = sphi 0, %s34
    %s16 = sphi 0, %s30
    %s17 = sphi 0, %s26
    %s18 = sphi 0, %s15
    %s19 = sphi 0, %s16
    %s20 = sphi 0, %s17
    %s21 = sphi 0, %s18
    %s22 = sphi 0, %s19
    %s23 = sphi 0, %s20
    %s41 = sphi 0, %s43
    %s44 = sphi 0, %s41
    %s45 = sphi 0, %s44
    %s61 = sphi 0, %s45
    %s69 = sphi 0, %s71
    %s72 = sphi 0, %s69
    %s73 = sphi 0, %s72
    %s89 = sphi 0, %s73
    %s99 = sphi 0, %s101
    %s102 = sphi 0, %s99
    %s103 = sphi 0, %s102
    %s119 = sphi 0, %s103
  $region4: #{positional_encoding.1} parent=0 // loop_header_branch
    %11 = sbr.rel (%p9) target = $region8
  $region5: #{positional_encoding.1} parent=0 // loop_body
    %s13 = ssub.s32 %s8, 1
    %s14 = ssub.s32 %s8, 2
    %s24 = sadd.s32 1, %s17
    %p25 = scmp.ge.s32.totalorder %s24, 2
    %s26 = scalar_select %p25, 0, %s24
    %s27 = sadd.s32 1, %s16
    %s28 = scalar_select %p25, %s27, %s16
    %p29 = scmp.ge.s32.totalorder %s28, 1
    %s30 = scalar_select %p29, 0, %s28
    %s31 = sadd.s32 1, %s15
    %s32 = scalar_select %p29, %s31, %s15
    %p33 = scmp.ge.s32.totalorder %s32, 1
    %s34 = scalar_select %p33, 0, %s32
    %s35 = ssub.s32 %s17, %s26
    %s36 = ssub.s32 %s15, %s34
    %s37 = sor.u32 %s35, %s36
    %s38 = ssub.s32 %s16, %s30
    %s39 = sor.u32 %s37, %s38
    %p40 = scmp.eq.s32.totalorder %s39, 0
    %s42 = sadd.s32 %s41, 1
    %s43 = scalar_select %p40, %s41, %s42
    %p46 = pneg %p40
    %p47 = scmp.eq.s32.totalorder %s8, 1
    %p48 = por %p46, %p47
    %p49 = scmp.ne.s32.totalorder %s41, %s44
    %p50 = scmp.eq.s32.totalorder %s8, 0
    %p51 = por %p49, %p50
    %p52 = scmp.ne.s32.totalorder %s41, %s44
    %p53 = scmp.eq.s32.totalorder %s13, 1
    %p54 = por %p52, %p53
    %p55 = scmp.ne.s32.totalorder %s44, %s45
    %p56 = scmp.eq.s32.totalorder %s13, 0
    %p57 = por %p55, %p56
    %p58 = scmp.ne.s32.totalorder %s44, %s45
    %p59 = scmp.eq.s32.totalorder %s14, 1
    %p60 = por %p58, %p59
    %p62 = scmp.ne.s32.totalorder %s45, %s61
    %p63 = scmp.eq.s32.totalorder %s14, 0
    %p64 = por %p62, %p63
    %s65 = ssub.s32 %s15, %s34
    %s66 = ssub.s32 %s16, %s30
    %s67 = sor.u32 %s65, %s66
    %p68 = scmp.eq.s32.totalorder %s67, 0
    %s70 = sadd.s32 %s69, 1
    %s71 = scalar_select %p68, %s69, %s70
    %p74 = pneg %p68
    %p75 = scmp.eq.s32.totalorder %s8, 1
    %p76 = por %p74, %p75
    %p77 = scmp.ne.s32.totalorder %s69, %s72
    %p78 = scmp.eq.s32.totalorder %s8, 0
    %p79 = por %p77, %p78
    %p80 = scmp.ne.s32.totalorder %s69, %s72
    %p81 = scmp.eq.s32.totalorder %s13, 1
    %p82 = por %p80, %p81
    %p83 = scmp.ne.s32.totalorder %s72, %s73
    %p84 = scmp.eq.s32.totalorder %s13, 0
    %p85 = por %p83, %p84
    %p86 = scmp.ne.s32.totalorder %s72, %s73
    %p87 = scmp.eq.s32.totalorder %s14, 1
    %p88 = por %p86, %p87
    %p90 = scmp.ne.s32.totalorder %s73, %s89
    %p91 = scmp.eq.s32.totalorder %s14, 0
    %p92 = por %p90, %p91
    %s93 = ssub.s32 %s17, %s26
    %s94 = ssub.s32 %s15, %s34
    %s95 = sor.u32 %s93, %s94
    %s96 = ssub.s32 %s16, %s30
    %s97 = sor.u32 %s95, %s96
    %p98 = scmp.eq.s32.totalorder %s97, 0
    %s100 = sadd.s32 %s99, 1
    %s101 = scalar_select %p98, %s99, %s100
    %p104 = pneg %p98
    %p105 = scmp.eq.s32.totalorder %s8, 1
    %p106 = por %p104, %p105
    %p107 = scmp.ne.s32.totalorder %s99, %s102
    %p108 = scmp.eq.s32.totalorder %s8, 0
    %p109 = por %p107, %p108
    %p110 = scmp.ne.s32.totalorder %s99, %s102
    %p111 = scmp.eq.s32.totalorder %s13, 1
    %p112 = por %p110, %p111
    %p113 = scmp.ne.s32.totalorder %s102, %s103
    %p114 = scmp.eq.s32.totalorder %s13, 0
    %p115 = por %p113, %p114
    %p116 = scmp.ne.s32.totalorder %s102, %s103
    %p117 = scmp.eq.s32.totalorder %s14, 1
    %p118 = por %p116, %p117
    %p120 = scmp.ne.s32.totalorder %s103, %s119
    %p121 = scmp.eq.s32.totalorder %s14, 0
    %p122 = por %p120, %p121
    %p123 = scmp.le.s32.totalorder 1, %s8
    %p124 = scmp.lt.s32.totalorder %s8, 3
    %p125 = pnand %p123, %p124
    %p126 = pneg %p125
    // Predicated region
    $region9: #{positional_encoding.1} parent=5 // pred_check
      _
    $region10: #{positional_encoding.1} parent=5 // pred_check_branch
      %128 = sbr.rel (%p125) target = $region12
    $region11: #{positional_encoding.1} parent=5 // pred_region
      %s129 = ssub.s32 %s8, 1
      // Predicated region
      $region13: #{positional_encoding.1} parent=11 // pred_check
        %p130 = pneg %p85
      $region14: #{positional_encoding.1} parent=11 // pred_check_branch
        %132 = sbr.rel (%p130) target = $region16
      $region15: #{positional_encoding.1} parent=11 // pred_region
        %p133 = scmp.lt.s32.totalorder %s18, 0
        %s134 = scalar_select %p133, %s18, 0
        %p135 = scmp.lt.s32.totalorder %s19, 0
        %s136 = scalar_select %p135, %s19, 0
        %s137 = sadd.s32 %s136, %s134
        %s138 = smul.addr %s137, 2
        %s139 = scalar_lea.vmem %s1, %s138
      $region16: #{positional_encoding.1} parent=11 // pred_fallthru
        _
    $region12: #{positional_encoding.1} parent=5 // pred_fallthru
      _
    %p140 = scmp.lt.s32.totalorder %s8, 2
    // Predicated region
    $region17: #{positional_encoding.1} parent=5 // pred_check
      %p141 = pneg %p140
    $region18: #{positional_encoding.1} parent=5 // pred_check_branch
      %143 = sbr.rel (%p141) target = $region20
    $region19: #{positional_encoding.1} parent=5 // pred_region
      // Predicated region
      $region21: #{positional_encoding.1} parent=19 // pred_check
        %p144 = pneg %p51
      $region22: #{positional_encoding.1} parent=19 // pred_check_branch
        %146 = sbr.rel (%p144) target = $region24
      $region23: #{positional_encoding.1} parent=19 // pred_region
        %p147 = scmp.lt.s32.totalorder %s17, 1
        %s148 = scalar_select %p147, %s17, 1
        %p149 = scmp.lt.s32.totalorder %s15, 0
        %s150 = scalar_select %p149, %s15, 0
        %p151 = scmp.lt.s32.totalorder %s16, 0
        %s152 = scalar_select %p151, %s16, 0
        %s153 = sadd.s32 %s152, %s150
        %s154 = sadd.s32 %s153, %s148
        %s155 = smul.addr %s154, 2
        %s156 = scalar_lea.vmem %s0, %s155
      $region24: #{positional_encoding.1} parent=19 // pred_fallthru
        _
    $region20: #{positional_encoding.1} parent=5 // pred_fallthru
      _
    %p157 = scmp.le.s32.totalorder 1, %s8
    %p158 = scmp.lt.s32.totalorder %s8, 3
    %p159 = pnand %p157, %p158
    %p160 = pneg %p159
    // Predicated region
    $region25: #{positional_encoding.1} parent=5 // pred_check
      _
    $region26: #{positional_encoding.1} parent=5 // pred_check_branch
      %162 = sbr.rel (%p159) target = $region28
    $region27: #{positional_encoding.1} parent=5 // pred_region
      %s163 = ssub.s32 %s8, 1
      %p164 = scmp.lt.s32.totalorder %s20, 1
      %s165 = scalar_select %p164, %s20, 1
      %p166 = scmp.lt.s32.totalorder %s18, 0
      %s167 = scalar_select %p166, %s18, 0
      %p168 = scmp.lt.s32.totalorder %s19, 0
      %s169 = scalar_select %p168, %s19, 0
      %s170 = sadd.s32 %s169, %s167
      %s171 = sadd.s32 %s170, %s165
      %s172 = smul.addr %s171, 2
      %s173 = scalar_lea.vmem %s0, %s172
      %p174 = pneg %p57
      %p175 = pneg %p54
      %p176 = scmp.lt.s32.totalorder %s18, 0
      %s177 = scalar_select %p176, %s18, 0
      %p178 = scmp.lt.s32.totalorder %s19, 0
      %s179 = scalar_select %p178, %s19, 0
      %s180 = sadd.s32 %s179, %s177
      %s181 = smul.addr %s180, 2
      %s182 = scalar_lea.vmem %s1, %s181
      %p183 = pneg %p85
      %p184 = pneg %p82
      %p185 = pneg %p115
      %p186 = pneg %p112
      %p187 = scmp.lt.s32.totalorder %s20, 1
      %s188 = scalar_select %p187, %s20, 1
      %p189 = scmp.lt.s32.totalorder %s18, 0
      %s190 = scalar_select %p189, %s18, 0
      %p191 = scmp.lt.s32.totalorder %s19, 0
      %s192 = scalar_select %p191, %s19, 0
      %s193 = sadd.s32 %s192, %s190
      %s194 = sadd.s32 %s193, %s188
      %s195 = smul.addr %s194, 2
      %s196 = scalar_lea.vmem %s2, %s195
      %p197 = scmp.lt.s32.totalorder %s20, 1
      %s198 = scalar_select %p197, %s20, 1
      %p199 = scmp.lt.s32.totalorder %s18, 0
      %s200 = scalar_select %p199, %s18, 0
      %p201 = scmp.lt.s32.totalorder %s19, 0
      %s202 = scalar_select %p201, %s19, 0
      %s203 = sadd.s32 %s202, %s200
      %s204 = sadd.s32 %s203, %s198
      %s205 = smul.addr %s204, 2
      %s206 = scalar_lea.vmem %s0, %s205
      %p207 = scmp.lt.s32.totalorder %s18, 0
      %s208 = scalar_select %p207, %s18, 0
      %p209 = scmp.lt.s32.totalorder %s19, 0
      %s210 = scalar_select %p209, %s19, 0
      %s211 = sadd.s32 %s210, %s208
      %s212 = smul.addr %s211, 2
      %s213 = scalar_lea.vmem %s1, %s212
      %p214 = scmp.lt.s32.totalorder %s20, 1
      %s215 = scalar_select %p214, %s20, 1
      %p216 = scmp.lt.s32.totalorder %s18, 0
      %s217 = scalar_select %p216, %s18, 0
      %p218 = scmp.lt.s32.totalorder %s19, 0
      %s219 = scalar_select %p218, %s19, 0
      %s220 = sadd.s32 %s219, %s217
      %s221 = sadd.s32 %s220, %s215
      %s222 = smul.addr %s221, 2
      %s223 = scalar_lea.vmem %s2, %s222
      %v224 = vld [vmem:[%s206] sm:$0x3]
      %v225 = vld [vmem:[%s213] sm:$0x3]
      %v226 = vadd.f32 %v224, %v225
      %227 = vst [vmem:[%s223] sm:$0x3] %v226
      %p228 = scmp.lt.s32.totalorder %s20, 1
      %s229 = scalar_select %p228, %s20, 1
      %p230 = scmp.lt.s32.totalorder %s18, 0
      %s231 = scalar_select %p230, %s18, 0
      %p232 = scmp.lt.s32.totalorder %s19, 0
      %s233 = scalar_select %p232, %s19, 0
      %s234 = sadd.s32 %s233, %s231
      %s235 = sadd.s32 %s234, %s229
      %s236 = smul.addr %s235, 2
      %s237 = scalar_lea.vmem %s2, %s236
      // Predicated region
      $region29: #{positional_encoding.1} parent=27 // pred_check
        %p238 = pneg %p112
      $region30: #{positional_encoding.1} parent=27 // pred_check_branch
        %240 = sbr.rel (%p238) target = $region32
      $region31: #{positional_encoding.1} parent=27 // pred_region
        _
      $region32: #{positional_encoding.1} parent=27 // pred_fallthru
        _
    $region28: #{positional_encoding.1} parent=5 // pred_fallthru
      _
    %p241 = scmp.le.s32.totalorder 2, %s8
    // Predicated region
    $region33: #{positional_encoding.1} parent=5 // pred_check
      %p242 = pneg %p241
    $region34: #{positional_encoding.1} parent=5 // pred_check_branch
      %244 = sbr.rel (%p242) target = $region36
    $region35: #{positional_encoding.1} parent=5 // pred_region
      %s245 = ssub.s32 %s8, 2
      // Predicated region
      $region37: #{positional_encoding.1} parent=35 // pred_check
        %p246 = pneg %p118
      $region38: #{positional_encoding.1} parent=35 // pred_check_branch
        %248 = sbr.rel (%p246) target = $region40
      $region39: #{positional_encoding.1} parent=35 // pred_region
        %p249 = scmp.lt.s32.totalorder %s23, 1
        %s250 = scalar_select %p249, %s23, 1
        %p251 = scmp.lt.s32.totalorder %s21, 0
        %s252 = scalar_select %p251, %s21, 0
        %p253 = scmp.lt.s32.totalorder %s22, 0
        %s254 = scalar_select %p253, %s22, 0
        %s255 = sadd.s32 %s254, %s252
        %s256 = sadd.s32 %s255, %s250
        %s257 = smul.addr %s256, 2
        %s258 = scalar_lea.vmem %s2, %s257
      $region40: #{positional_encoding.1} parent=35 // pred_fallthru
        _
    $region36: #{positional_encoding.1} parent=5 // pred_fallthru
      _
  $region6: #{positional_encoding.1} parent=0 // loop_footer
    %s12 = sadd.s32 1, %s8
  $region7: #{positional_encoding.1} parent=0 // loop_footer_branch
    %7 = sbr.rel target = $region3
  $region8: #{positional_encoding.1} parent=0 // loop_exit
    _

</llo_original>
